<compile_context>
chip_gen: v7x
topology: tpu7x:2x2x1
jax: 0.10.0
libtpu: 0.0.40
codegen_flags: <defaults>
</compile_context>

<pallas_src>
import functools
import math

import jax
import jax.numpy as jnp
from jax.experimental import pallas as pl
from jax.experimental.pallas import tpu as pltpu


def _roll_rows(x, shift):
    """Static circular roll along axis 0 of a 2-D array: out[r] = x[(r - shift) % n]."""
    n = x.shape[0]
    shift = shift % n
    if shift == 0:
        return x
    return jnp.concatenate([x[n - shift:, :], x[:n - shift, :]], axis=0)


def token_embed_kernel(x_ref, w_ref, b_ref, o_ref, cat_ref, *, seq_len):
    # x_ref:   (R, C)   caller dtype (f32/bf16); R = Bt * L rows (whole sequences)
    # w_ref:   (3C, Dp) compute dtype, resident across grid steps
    # b_ref:   (1, Dp)  f32, resident
    # o_ref:   (R, Dp)  output dtype (bf16 fast path)
    # cat_ref: (R, 3C)  VMEM scratch holding the im2col slab
    x = x_ref[...].astype(w_ref.dtype)          # cast in-register (no wrapper cast pass)
    rows, c = x.shape
    l = seq_len
    # Within-sequence position of every flattened row (sequences are contiguous).
    pos = jax.lax.broadcasted_iota(jnp.int32, (rows, 1), 0) % l
    # Circular neighbours along each length-L sequence of the flattened rows:
    #   prev: x[r-1], except the first row of a sequence takes x[r+L-1]
    #   next: x[r+1], except the last  row of a sequence takes x[r-L+1]
    x_prev = jnp.where(pos == 0, _roll_rows(x, 1 - l), _roll_rows(x, 1))
    x_next = jnp.where(pos == l - 1, _roll_rows(x, l - 1), _roll_rows(x, -1))
    # im2col: stage [prev | cur | next] into one (R, 3C) slab -> single K=3C matmul.
    cat_ref[:, 0:c] = x_prev
    cat_ref[:, c:2 * c] = x
    cat_ref[:, 2 * c:3 * c] = x_next
    acc = jnp.dot(cat_ref[...], w_ref[...], preferred_element_type=jnp.float32)
    o_ref[...] = (acc + b_ref[...]).astype(o_ref.dtype)    # f32 bias add, single cast


def _choose_batch_block(B, L, C, Dp, compute_itemsize, out_itemsize,
                        *, target_rows=512, vmem_budget_bytes=8 << 20):
    """Pick Bt (whole sequences per grid step): >= target rows when possible,
    legal BlockSpec second-minor (Bt*L % 8 == 0 or Bt == B), under VMEM budget."""
    def step_bytes(bt):
        rows = bt * L
        return (2 * rows * C * 4                                  # dbl-buffered f32 input block
                + 2 * rows * Dp * out_itemsize                    # dbl-buffered output block
                + rows * 3 * C * compute_itemsize                 # im2col scratch (single)
                + 2 * (3 * C * Dp * compute_itemsize + Dp * 4))   # resident W_cat + bias
    divisors = [d for d in range(1, B + 1) if B % d == 0]
    legal = [d for d in divisors
             if ((d * L) % 8 == 0 or d == B) and step_bytes(d) <= vmem_budget_bytes]
    if not legal:
        # Fall back to one whole-array block (always spec-legal).  Very long L would
        # instead need an L-tile grid axis with 2-row circular halos.
        return B
    for d in legal:
        if d * L >= target_rows:
            return d
    return legal[-1]


def token_embedding(x, weight, bias, *, compute_dtype=jnp.bfloat16, out_dtype=None):
    """Circular Conv1d token embedding.

    x: (B, L, C); weight: (D, C, 3) (PyTorch Conv1d layout); bias: (D,).
    Returns (B, L, D) in `out_dtype` (defaults to `compute_dtype`).
    """
    if out_dtype is None:
        out_dtype = compute_dtype
    B, L, C = x.shape
    D = weight.shape[0]
    Dp = ((D + 127) // 128) * 128            # lane-dense output width

    # Fused per-tap weights: rows [0:C]=tap0 (x[l-1]), [C:2C]=tap1 (x[l]), [2C:3C]=tap2 (x[l+1]).
    w_cat = jnp.concatenate([weight[:, :, k].T for k in range(3)], axis=0)   # (3C, D)
    w_cat = jnp.pad(w_cat, ((0, 0), (0, Dp - D))).astype(compute_dtype)      # (3C, Dp)
    b2d = jnp.pad(bias.astype(jnp.float32), (0, Dp - D)).reshape(1, Dp)

    cdt = jnp.dtype(compute_dtype).itemsize
    odt = jnp.dtype(out_dtype).itemsize
    Bt = _choose_batch_block(B, L, C, Dp, cdt, odt)
    rows = Bt * L

    # Flatten batches of whole sequences into row blocks (free bitcast reshape).
    x2 = x.reshape(B * L, C)

    cost = pl.CostEstimate(
        flops=2 * B * L * 3 * C * Dp,
        transcendentals=0,
        bytes_accessed=int(B * L * C * x2.dtype.itemsize       # x read once
                           + 3 * C * Dp * cdt + Dp * 4         # resident weights + bias
                           + B * L * Dp * odt),                 # output written once
    )

    kernel = functools.partial(token_embed_kernel, seq_len=L)
    out2 = pl.pallas_call(
        kernel,
        out_shape=jax.ShapeDtypeStruct((B * L, Dp), out_dtype),
        grid=(B // Bt,),
        in_specs=[
            pl.BlockSpec((rows, C), lambda i: (i, 0)),     # Bt whole sequences / step
            pl.BlockSpec((3 * C, Dp), lambda i: (0, 0)),   # fused weights (resident)
            pl.BlockSpec((1, Dp), lambda i: (0, 0)),       # bias (resident)
        ],
        out_specs=pl.BlockSpec((rows, Dp), lambda i: (i, 0)),
        scratch_shapes=[pltpu.VMEM((rows, 3 * C), compute_dtype)],   # im2col slab
        compiler_params=pltpu.CompilerParams(
            dimension_semantics=("parallel",),   # megacore sharding over row blocks
        ),
        cost_estimate=cost,
    )(x2, w_cat, b2d)

    out = out2.reshape(B, L, Dp)
    if Dp != D:
        # Extra HBM pass; make d_model a multiple of 128 (or consume the padded
        # layout downstream) to avoid it.
        out = out[:, :, :D]
    return out


def init_params(key, c_in, d_model):
    """Deterministic init matching the module's __init__ (shapes & distributions)."""
    k_w, k_b = jax.random.split(key)
    fan_in = c_in * 3
    # kaiming_normal_(mode='fan_in', nonlinearity='leaky_relu', a=0) -> gain = sqrt(2)
    std = math.sqrt(2.0) / math.sqrt(fan_in)
    weight = std * jax.random.normal(k_w, (d_model, c_in, 3), dtype=jnp.float32)
    # Conv1d default bias init: U(-1/sqrt(fan_in), 1/sqrt(fan_in))
    bound = 1.0 / math.sqrt(fan_in)
    bias = jax.random.uniform(k_b, (d_model,), jnp.float32, -bound, bound)
    return weight, bias


def reference(x, weight, bias):
    """Pure-JAX reference of the circular conv (for correctness check)."""
    x_prev = jnp.roll(x, 1, axis=1)
    x_next = jnp.roll(x, -1, axis=1)
    return (jnp.einsum("blc,dc->bld", x_prev, weight[:, :, 0])
            + jnp.einsum("blc,dc->bld", x, weight[:, :, 1])
            + jnp.einsum("blc,dc->bld", x_next, weight[:, :, 2])
            + bias[None, None, :])


if __name__ == "__main__":
    B, L, C, D = 2, 8, 4, 32  # batch, seq, c_in, d_model
    key = jax.random.PRNGKey(0)
    k_x, k_p = jax.random.split(key)
    x = jax.random.normal(k_x, (B, L, C), dtype=jnp.float32)
    weight, bias = init_params(k_p, C, D)

    y_ref = reference(x, weight, bias)

    # f32 path: tight check of kernel semantics.
    y32 = jax.block_until_ready(
        token_embedding(x, weight, bias, compute_dtype=jnp.float32))
    assert y32.shape == (B, L, D)
    assert jnp.allclose(y32, y_ref, atol=1e-4, rtol=1e-4), "f32 mismatch vs reference"

    # Default fast path: bf16 compute + bf16 output, f32 MXU accumulation (loose check).
    y16 = jax.block_until_ready(token_embedding(x, weight, bias))
    assert y16.shape == (B, L, D)
    assert jnp.allclose(y16.astype(jnp.float32), y_ref, atol=5e-2, rtol=5e-2), \
        "bf16 mismatch vs reference"

    print("KERNEL_OK")
</pallas_src>

<mosaic_0001>
module attributes {stable_mosaic.version = 11 : i64} {
  func.func @token_embed_kernel(%arg0: i32, %arg1: memref<16x4xf32, #tpu.memory_space<vmem>>, %arg2: memref<12x128xf32, #tpu.memory_space<vmem>>, %arg3: memref<1x128xf32, #tpu.memory_space<vmem>>, %arg4: memref<16x128xf32, #tpu.memory_space<vmem>>, %arg5: memref<16x12xf32, #tpu.memory_space<vmem>>) attributes {dimension_semantics = [#tpu.dimension_semantics<parallel>], iteration_bounds = array<i64: 1>, scalar_prefetch = 0 : i64, scratch_operands = 1 : i64, tpu.core_type = #tpu.core_type<tc>, window_params = [{transform_indices = @transform_0, window_bounds = array<i64: 16, 4>}, {pipeline_mode = #tpu.pipeline_mode<synchronous>, transform_indices = @transform_1, window_bounds = array<i64: 12, 128>}, {pipeline_mode = #tpu.pipeline_mode<synchronous>, transform_indices = @transform_2, window_bounds = array<i64: 1, 128>}, {transform_indices = @transform_3, window_bounds = array<i64: 16, 128>}]} {
    %c0 = arith.constant 0 : index
    %c0_0 = arith.constant 0 : index
    %0 = vector.load %arg1[%c0, %c0_0] : memref<16x4xf32, #tpu.memory_space<vmem>>, vector<16x4xf32>
    %1 = tpu.iota {dimensions = array<i32: 0>} : vector<16x1xi32>
    %c8_i32 = arith.constant 8 : i32
    %c0_i32 = arith.constant 0 : i32
    %2 = arith.cmpi eq, %c8_i32, %c0_i32 : i32
    %c1_i32 = arith.constant 1 : i32
    %3 = arith.select %2, %c1_i32, %c8_i32 : i32
    %4 = vector.broadcast %3 : i32 to vector<16x1xi32>
    %5 = arith.remsi %1, %4 : vector<16x1xi32>
    %c0_i32_1 = arith.constant 0 : i32
    %6 = vector.broadcast %c0_i32_1 : i32 to vector<16x1xi32>
    %7 = arith.cmpi ne, %5, %6 : vector<16x1xi32>
    %c0_i32_2 = arith.constant 0 : i32
    %8 = vector.broadcast %c0_i32_2 : i32 to vector<16x1xi32>
    %9 = arith.cmpi slt, %5, %8 : vector<16x1xi32>
    %c0_i32_3 = arith.constant 0 : i32
    %10 = arith.cmpi slt, %3, %c0_i32_3 : i32
    %11 = vector.broadcast %10 : i1 to vector<16x1xi1>
    %12 = vector.broadcast %11 : vector<16x1xi1> to vector<16x1xi1>
    %13 = arith.xori %9, %12 : vector<16x1xi1>
    %14 = arith.andi %13, %7 : vector<16x1xi1>
    %15 = vector.broadcast %3 : i32 to vector<16x1xi32>
    %16 = arith.addi %5, %15 : vector<16x1xi32>
    %17 = arith.select %14, %16, %5 : vector<16x1xi1>, vector<16x1xi32>
    %c0_i32_4 = arith.constant 0 : i32
    %18 = vector.broadcast %c0_i32_4 : i32 to vector<16x1xi32>
    %19 = arith.cmpi eq, %17, %18 : vector<16x1xi32>
    %20 = vector.extract_strided_slice %0 {offsets = [7, 0], sizes = [9, 4], strides = [1, 1]} : vector<16x4xf32> to vector<9x4xf32>
    %21 = vector.extract_strided_slice %0 {offsets = [0, 0], sizes = [7, 4], strides = [1, 1]} : vector<16x4xf32> to vector<7x4xf32>
    %22 = tpu.concatenate %20, %21 in 0 : vector<9x4xf32>, vector<7x4xf32> -> vector<16x4xf32>
    %23 = vector.extract_strided_slice %0 {offsets = [15, 0], sizes = [1, 4], strides = [1, 1]} : vector<16x4xf32> to vector<1x4xf32>
    %24 = vector.extract_strided_slice %0 {offsets = [0, 0], sizes = [15, 4], strides = [1, 1]} : vector<16x4xf32> to vector<15x4xf32>
    %25 = tpu.concatenate %23, %24 in 0 : vector<1x4xf32>, vector<15x4xf32> -> vector<16x4xf32>
    %26 = vector.shape_cast %19 : vector<16x1xi1> to vector<16x1xi1>
    %27 = vector.broadcast %26 : vector<16x1xi1> to vector<16x4xi1>
    %28 = arith.select %27, %22, %25 : vector<16x4xi1>, vector<16x4xf32>
    %c7_i32 = arith.constant 7 : i32
    %29 = vector.broadcast %c7_i32 : i32 to vector<16x1xi32>
    %30 = arith.cmpi eq, %17, %29 : vector<16x1xi32>
    %31 = vector.extract_strided_slice %0 {offsets = [9, 0], sizes = [7, 4], strides = [1, 1]} : vector<16x4xf32> to vector<7x4xf32>
    %32 = vector.extract_strided_slice %0 {offsets = [0, 0], sizes = [9, 4], strides = [1, 1]} : vector<16x4xf32> to vector<9x4xf32>
    %33 = tpu.concatenate %31, %32 in 0 : vector<7x4xf32>, vector<9x4xf32> -> vector<16x4xf32>
    %34 = vector.extract_strided_slice %0 {offsets = [1, 0], sizes = [15, 4], strides = [1, 1]} : vector<16x4xf32> to vector<15x4xf32>
    %35 = vector.extract_strided_slice %0 {offsets = [0, 0], sizes = [1, 4], strides = [1, 1]} : vector<16x4xf32> to vector<1x4xf32>
    %36 = tpu.concatenate %34, %35 in 0 : vector<15x4xf32>, vector<1x4xf32> -> vector<16x4xf32>
    %37 = vector.shape_cast %30 : vector<16x1xi1> to vector<16x1xi1>
    %38 = vector.broadcast %37 : vector<16x1xi1> to vector<16x4xi1>
    %39 = arith.select %38, %33, %36 : vector<16x4xi1>, vector<16x4xf32>
    %c0_5 = arith.constant 0 : index
    %c0_6 = arith.constant 0 : index
    %40 = vector.load %arg5[%c0_5, %c0_6] : memref<16x12xf32, #tpu.memory_space<vmem>>, vector<16x4xf32>
    tpu.vector_store %arg5[%c0_5, %c0_6], %28 {strides = array<i32>} : memref<16x12xf32, #tpu.memory_space<vmem>>, vector<16x4xf32>,
    %c0_7 = arith.constant 0 : index
    %c4 = arith.constant 4 : index
    %41 = vector.load %arg5[%c0_7, %c4] : memref<16x12xf32, #tpu.memory_space<vmem>>, vector<16x4xf32>
    tpu.vector_store %arg5[%c0_7, %c4], %0 {strides = array<i32>} : memref<16x12xf32, #tpu.memory_space<vmem>>, vector<16x4xf32>,
    %c0_8 = arith.constant 0 : index
    %c8 = arith.constant 8 : index
    %42 = vector.load %arg5[%c0_8, %c8] : memref<16x12xf32, #tpu.memory_space<vmem>>, vector<16x4xf32>
    tpu.vector_store %arg5[%c0_8, %c8], %39 {strides = array<i32>} : memref<16x12xf32, #tpu.memory_space<vmem>>, vector<16x4xf32>,
    %c0_9 = arith.constant 0 : index
    %c0_10 = arith.constant 0 : index
    %43 = vector.load %arg5[%c0_9, %c0_10] : memref<16x12xf32, #tpu.memory_space<vmem>>, vector<16x12xf32>
    %c0_11 = arith.constant 0 : index
    %c0_12 = arith.constant 0 : index
    %44 = vector.load %arg2[%c0_11, %c0_12] : memref<12x128xf32, #tpu.memory_space<vmem>>, vector<12x128xf32>
    %cst = arith.constant dense<0.000000e+00> : vector<16x128xf32>
    %45 = tpu.matmul %43, %44, %cst {dimension_numbers = #tpu.dot_dimension_numbers<[1], [0], [0], [1], [0, 0, 1, 1], [], []>} : vector<16x12xf32>, vector<12x128xf32>, vector<16x128xf32> -> vector<16x128xf32>
    %c0_13 = arith.constant 0 : index
    %c0_14 = arith.constant 0 : index
    %46 = vector.load %arg3[%c0_13, %c0_14] : memref<1x128xf32, #tpu.memory_space<vmem>>, vector<1x128xf32>
    %47 = vector.broadcast %46 : vector<1x128xf32> to vector<16x128xf32>
    %48 = arith.addf %45, %47 : vector<16x128xf32>
    %c0_15 = arith.constant 0 : index
    %c0_16 = arith.constant 0 : index
    %49 = vector.load %arg4[%c0_15, %c0_16] : memref<16x128xf32, #tpu.memory_space<vmem>>, vector<16x128xf32>
    tpu.vector_store %arg4[%c0_15, %c0_16], %48 {strides = array<i32>} : memref<16x128xf32, #tpu.memory_space<vmem>>, vector<16x128xf32>,
    return
  }
  func.func @transform_0(%arg0: i32) -> (i32, i32) {
    %c0_i32 = arith.constant 0 : i32
    %c0_i32_0 = arith.constant 0 : i32
    return %arg0, %c0_i32 : i32, i32
  }
  func.func @transform_1(%arg0: i32) -> (i32, i32) {
    %c0_i32 = arith.constant 0 : i32
    %c0_i32_0 = arith.constant 0 : i32
    %c0_i32_1 = arith.constant 0 : i32
    return %c0_i32, %c0_i32_0 : i32, i32
  }
  func.func @transform_2(%arg0: i32) -> (i32, i32) {
    %c0_i32 = arith.constant 0 : i32
    %c0_i32_0 = arith.constant 0 : i32
    %c0_i32_1 = arith.constant 0 : i32
    return %c0_i32, %c0_i32_0 : i32, i32
  }
  func.func @transform_3(%arg0: i32) -> (i32, i32) {
    %c0_i32 = arith.constant 0 : i32
    %c0_i32_0 = arith.constant 0 : i32
    return %arg0, %c0_i32 : i32, i32
  }
}

</mosaic_0001>

<llo_original>
// kernel: tpu_custom_call.1
$region0: #{tpu_custom_call.1}
  #allocation0 [shape = 'u32[]', space=smem, size = 0x4, offset = 0x4, fixed_abs, tag = 'smem constant byte address 0x4 - core index']
  #allocation1 [shape = 'u32[144,128]{1,0:T(1,128)}', space=vmem, size = 0x12000, scoped, tag = 'internal scratch']
  #allocation2 [shape = 'f32[16,12]{1,0:T(8,128)}', space=vmem, size = 0x2000, scoped, tag = 'scratch operand']
  %s0 = inlined_call_operand.vmem [shape: f32[16,4], index: 0, kind: input, shape index: {}]
  %s1 = inlined_call_operand.vmem [shape: f32[12,128], index: 1, kind: input, shape index: {}]
  %s2 = inlined_call_operand.vmem [shape: f32[1,128], index: 2, kind: input, shape index: {}]
  %s3 = inlined_call_operand.hbm [shape: f32[16,128], index: 3, kind: output, shape index: {}]
  %s4 = sld [smem:[#allocation0]]
  $region22: #{tpu_custom_call.1} parent=0
    _
  %s6 = ssub.s32 1, %s4
  %s7 = scalar_select 0, %s6, %s4
  $region1: #{tpu_custom_call.1} parent=0
    #allocation3 [shape = 'u8[8192]{0}', space=vmem, size = 0x2000, scoped, tag = 'output window, operand 0, single buffered']
    #allocation4 [shape = 's32[1]{0}', space=sflag, size = 0x4, scoped, tag = 'scoped memory for tpu_custom_call.1']
    %8 = vsyncpa [#allocation4], 0
    // Predicated region
    $region2: #{tpu_custom_call.1} parent=1 // pred_check
      _
    $region3: #{tpu_custom_call.1} parent=1 // pred_check_branch
      %10 = sbr.rel (0) target = $region5
    $region4: #{tpu_custom_call.1} parent=1 // pred_region
      _
    $region5: #{tpu_custom_call.1} parent=1 // pred_fallthru
      _
    // Predicated region
    $region6: #{tpu_custom_call.1} parent=1 // pred_check
      _
    $region7: #{tpu_custom_call.1} parent=1 // pred_check_branch
      %12 = sbr.rel (0) target = $region9
    $region8: #{tpu_custom_call.1} parent=1 // pred_region
      _
    $region9: #{tpu_custom_call.1} parent=1 // pred_fallthru
      _
    // Predicated region
    $region10: #{tpu_custom_call.1} parent=1 // pred_check
      _
    $region11: #{tpu_custom_call.1} parent=1 // pred_check_branch
      %14 = sbr.rel (0) target = $region13
    $region12: #{tpu_custom_call.1} parent=1 // pred_region
      _
    $region13: #{tpu_custom_call.1} parent=1 // pred_fallthru
      _
    %v15 = vld [vmem:[%s0] sm:$0xff]
    %v16 = vld [vmem:[%s0 + $0x8] sm:$0xff]
    %v17 = vlaneseq
    %v18 = vshrl.u32 %v17, 7
    %v19 = vadd.s32 %v18, 8
    %vm20 = vcmp.lt.s32.totalorder %v18, 0
    %v21 = vsub.s32 0, %v18
    %v22 = vsel %vm20, %v21, %v18
    %v23 = vshrl.u32 %v22, 3
    %v24 = vand.u32 %v22, 7
    %v25 = vsub.s32 0, %v24
    %v26 = vsel %vm20, %v25, %v24
    %vm27 = vcmp.lt.s32.totalorder %v19, 0
    %v28 = vsub.s32 0, %v19
    %v29 = vsel %vm27, %v28, %v19
    %v30 = vshrl.u32 %v29, 3
    %v31 = vand.u32 %v29, 7
    %v32 = vsub.s32 0, %v31
    %v33 = vsel %vm27, %v32, %v31
    %vm34 = vcmp.ne.s32.totalorder %v26, 0
    %vm35 = vcmp.ne.s32.totalorder %v33, 0
    %vm36 = vcmp.lt.s32.totalorder %v26, 0
    %vm37 = vcmp.lt.s32.totalorder %v33, 0
    %vm38 = vmand %vm36, %vm34
    %vm39 = vmand %vm37, %vm35
    %v40 = vadd.s32 %v26, 8
    %v41 = vadd.s32 %v33, 8
    %v42 = vsel %vm38, %v40, %v26
    %v43 = vsel %vm39, %v41, %v33
    %vm44 = vcmp.eq.s32.totalorder %v42, 0
    %vm45 = vcmp.eq.s32.totalorder %v43, 0
    %vm48 = vcmask 1040384
    %v49 = vrot.slane %v15, 7
    %v50 = vrot.slane %v16, 7
    %v51 = vsel %vm48, %v49, %v50
    %v55 = vsel %vm48, %v50, %v49
    %v56 = vsel %vm44, 1, 0
    %v57 = vsel %vm45, 1, 0
    %vm58 = vcmp.eq.s32.totalorder %v56, 1
    %vm59 = vcmp.eq.s32.totalorder %v57, 1
    %v60 = vsel %vm58, %v51, %v55
    %v61 = vsel %vm59, %v55, %v51
    %vm62 = vcmp.eq.s32.totalorder %v42, 7
    %vm63 = vcmp.eq.s32.totalorder %v43, 7
    %v64 = vrot.slane %v16, 1
    %vm66 = vcmask 1046528
    %v67 = vrot.slane %v15, 1
    %v68 = vsel %vm66, %v67, %v64
    %v71 = vsel %vm66, %v64, %v67
    %v72 = vsel %vm62, 1, 0
    %v73 = vsel %vm63, 1, 0
    %vm74 = vcmp.eq.s32.totalorder %v72, 1
    %vm75 = vcmp.eq.s32.totalorder %v73, 1
    %v76 = vsel %vm74, %v71, %v68
    %v77 = vsel %vm75, %v68, %v71
    %vm78 = vcmask 31744
    %79 = vst.msk [vmem:[#allocation2] sm:$0xff] %vm78, %v60
    %80 = vst.msk [vmem:[#allocation2 + $0x8] sm:$0xff] %vm78, %v61
    %81 = vrot.lane.b32.xlu0 %v15, 4
    %v82 = vpop.permute.xlu0 %81
    %83 = vrot.lane.b32.xlu0 %v16, 4
    %v84 = vpop.permute.xlu0 %83
    %vm87 = vcmask 64544
    %88 = vst.msk [vmem:[#allocation2] sm:$0xff] %vm87, %v82
    %89 = vst.msk [vmem:[#allocation2 + $0x8] sm:$0xff] %vm87, %v84
    %92 = vrot.lane.b32.xlu0 %v76, 8
    %v93 = vpop.permute.xlu0 %92
    %94 = vrot.lane.b32.xlu0 %v77, 8
    %v95 = vpop.permute.xlu0 %94
    %vm98 = vcmask 97344
    %99 = vst.msk [vmem:[#allocation2] sm:$0xff] %vm98, %v93
    %100 = vst.msk [vmem:[#allocation2 + $0x8] sm:$0xff] %vm98, %v95
    %v101 = vld [vmem:[#allocation2] sm:$0xff]
    %v102 = vld [vmem:[#allocation2 + $0x8] sm:$0xff]
    %v103 = vld [vmem:[%s1] sm:$0xff]
    %v104 = vld [vmem:[%s1 + $0x8] sm:$0xf]
    %v105 = vld [vmem:[%s2] sm:$0x1]
    %v107 = vlaneseq
    %v108 = vshrl.u32 %v107, 7
    %v109 = vsub.s32 0, %v108
    %v110 = vrot.slane %v105, %v109
    %vm112 = vcmask 97280
    %v114 = vsel %vm112, %v101, 0
    %v117 = vsel %vm112, %v102, 0
    %vm119 = vcmask 1043456
    %v121 = vsel %vm119, %v104, 0
    %123 = vmatprep.subr.mxu0 0.0
    %124 = vmatpush1.msra.mxu0 %v103
    %125 = vmatprep.subr.mxu0 0.0
    %126 = vmatpush1.msra.mxu0 %v121
    %127 = vmatprep.subr.mxu0 0.0
    %128 = vmatpush1.msra.mxu0 0.0
    %129 = vmatprep.subr.mxu0 0.0
    %130 = vmatpush1.msra.mxu0 0.0
    %131 = vmatprep.subr.mxu0 0.0
    %132 = vmatpush1.msra.mxu0 0.0
    %133 = vmatprep.subr.mxu0 0.0
    %134 = vmatpush1.msra.mxu0 0.0
    %135 = vmatprep.subr.mxu0 0.0
    %136 = vmatpush1.msra.mxu0 0.0
    %137 = vmatprep.subr.mxu0 0.0
    %138 = vmatpush1.msra.mxu0 0.0
    %139 = vmatprep.subr.mxu0 0.0
    %140 = vmatpush1.msra.mxu0 0.0
    %141 = vmatprep.subr.mxu0 0.0
    %142 = vmatpush1.msra.mxu0 0.0
    %143 = vmatprep.subr.mxu0 0.0
    %144 = vmatpush1.msra.mxu0 0.0
    %145 = vmatprep.subr.mxu0 0.0
    %146 = vmatpush1.msra.mxu0 0.0
    %147 = vmatprep.subr.mxu0 0.0
    %148 = vmatpush1.msra.mxu0 0.0
    %149 = vmatprep.subr.mxu0 0.0
    %150 = vmatpush1.msra.mxu0 0.0
    %151 = vmatprep.subr.mxu0 0.0
    %152 = vmatpush1.msra.mxu0 0.0
    %153 = vmatprep.subr.mxu0 0.0
    %154 = vmatpush1.msra.mxu0 0.0
    %155 = vmatprep.subr.mxu0 0.0
    %156 = vmatpush1.msra.mxu0 0.0
    %157 = vmatprep.subr.mxu0 0.0
    %158 = vmatpush1.msra.mxu0 0.0
    %159 = vmatprep.subr.mxu0 0.0
    %160 = vmatpush1.msra.mxu0 0.0
    %161 = vmatprep.subr.mxu0 0.0
    %162 = vmatpush1.msra.mxu0 0.0
    %163 = vmatprep.subr.mxu0 0.0
    %164 = vmatpush1.msra.mxu0 0.0
    %165 = vmatprep.subr.mxu0 0.0
    %166 = vmatpush1.msra.mxu0 0.0
    %167 = vmatprep.subr.mxu0 0.0
    %168 = vmatpush1.msra.mxu0 0.0
    %169 = vmatprep.subr.mxu0 0.0
    %170 = vmatpush1.msra.mxu0 0.0
    %171 = vmatprep.subr.mxu0 0.0
    %172 = vmatpush1.msra.mxu0 0.0
    %173 = vmatprep.subr.mxu0 0.0
    %174 = vmatpush1.msra.mxu0 0.0
    %175 = vmatprep.subr.mxu0 0.0
    %176 = vmatpush1.msra.mxu0 0.0
    %177 = vmatprep.subr.mxu0 0.0
    %178 = vmatpush1.msra.mxu0 0.0
    %179 = vmatprep.subr.mxu0 0.0
    %180 = vmatpush1.msra.mxu0 0.0
    %181 = vmatprep.subr.mxu0 0.0
    %182 = vmatpush1.msra.mxu0 0.0
    %183 = vmatprep.subr.mxu0 0.0
    %184 = vmatpush1.msra.mxu0 0.0
    %185 = vmatprep.subr.mxu0 0.0
    %186 = vmatpush1.msra.mxu0 0.0
    %187 = vmatprep.mubr.f32.mxu0 0.0
    %188 = vmatmul.mubr.f32.gmra.mrb[0].mxu0 %v114
    %v189 = vpop.f32.mrb[0].mxu0
    %v190 = vadd.f32 %v110, %v189
    %v191 = vpop.f32.mrb[0].mxu0
    %192 = vmatprep.mubr.f32.mxu0 0.0
    %193 = vmatmul.mubr.f32.gmra.mrb[0].mxu0 %v117
    %v194 = vpop.f32.mrb[0].mxu0
    %v195 = vadd.f32 %v110, %v194
    %v196 = vpop.f32.mrb[0].mxu0
    %197 = vdwg.mxu0
    %198 = vst [vmem:[#allocation3] sm:$0xff] %v190
    %199 = vst [vmem:[#allocation3 + $0x8] sm:$0xff] %v195
    // Predicated region
    $region14: #{tpu_custom_call.1} parent=1 // pred_check
      _
    $region15: #{tpu_custom_call.1} parent=1 // pred_check_branch
      %201 = sbr.rel (0) target = $region17
    $region16: #{tpu_custom_call.1} parent=1 // pred_region
      %s203 = ssub.s32 256, 256
      %204 = vsyncadd [#allocation4], %s203
      %s205 = sshll.u32 [#allocation3], 4
      %s206 = int_to_ptr.vmem [resolvable:$true] %s205
      %211 = dma.vmem_to_hbm [thread:$0]  %s206, 256, %s3, [#allocation4], 128, 128, 8
    $region17: #{tpu_custom_call.1} parent=1 // pred_fallthru
      _
    // Predicated region
    $region18: #{tpu_custom_call.1} parent=1 // pred_check
      _
    $region19: #{tpu_custom_call.1} parent=1 // pred_check_branch
      %213 = sbr.rel (0) target = $region21
    $region20: #{tpu_custom_call.1} parent=1 // pred_region
      %214 = dma.done [#allocation4], 256
    $region21: #{tpu_custom_call.1} parent=1 // pred_fallthru
      _
    %215 = vsyncpa [#allocation4], 1

</llo_original>
